<compile_context>
chip_gen: v7x
topology: tpu7x:2x2x1
jax: 0.10.0
libtpu: 0.0.40
codegen_flags: <defaults>
</compile_context>

<pallas_src>
import functools

import jax
import jax.numpy as jnp
from jax import lax
from jax.experimental import pallas as pl
from jax.experimental.pallas import tpu as pltpu


def _round_up(x, m):
    return (x + m - 1) // m * m


def _loss_kernel(w_ref, b_ref, hdiag_ref, labels_ref, mean_ref, var_ref,
                 out_ref, *, n_valid):
    step = pl.program_id(0)

    mean = mean_ref[...]                          # (tn, K) streamed, native dtype
    var = var_ref[...]                            # (tn, K) streamed
    labels = labels_ref[...]                      # (tn, 1) int32
    b = b_ref[...].astype(jnp.float32)            # (1, d)   resident
    h_diag = hdiag_ref[...]                       # (1, K)   resident, f32
    W = w_ref[...].astype(mean.dtype)             # (d, K)   resident

    d = W.shape[0]
    tn = mean.shape[0]
    inv_d2 = 1.0 / float(d * d)

    # logsumexp(b): logits of "0 @ W^T + b" are just b for every row (O(d) EUP)
    b_max = jnp.max(b, axis=1, keepdims=True)                          # (1, 1)
    lse = b_max + jnp.log(jnp.sum(jnp.exp(b - b_max), axis=1, keepdims=True))

    # ---- single MXU matmul: Z = mean @ W^T (contracts K, the only big dim) --
    # precision pinned explicitly; for v5e, casting mean/W to bf16 (f32 acc)
    # keeps it at the HBM roofline if the approximation tolerates it.
    Z = lax.dot_general(mean, W, (((1,), (1,)), ((), ())),
                        precision=lax.Precision.DEFAULT,
                        preferred_element_type=jnp.float32)            # (tn, d)

    # label selection in d-space without materializing a f32 one-hot
    class_iota = lax.broadcasted_iota(jnp.int32, (tn, d), 1)
    label_hit = class_iota == labels                                   # (tn, d)
    b_at_label = jnp.sum(jnp.where(label_hit, b, 0.0), axis=1, keepdims=True)
    z_at_label = jnp.sum(jnp.where(label_hit, Z, 0.0), axis=1, keepdims=True)

    # cross entropy: ce_i = lse(b) - b[y_i]
    ce = lse - b_at_label                                              # (tn, 1)

    # term1 = (grad_f * mean).sum(1) = Z[i, y_i] - rowsum(Z)_i / d
    row_sum_z = jnp.sum(Z, axis=1, keepdims=True)                      # (tn, 1)
    term1 = z_at_label - row_sum_z * (1.0 / d)

    # term2 = 0.5 * (diag(H) * var).sum(1)   (VPU/XLU; do NOT move to MXU)
    term2 = 0.5 * jnp.sum(h_diag * var.astype(jnp.float32), axis=1, keepdims=True)

    # term3 = 0.5 * (mean * (mean @ H^T)).sum(1)
    #       = -0.5/d^2 * (d * rowsum(Z*Z) - rowsum(Z)^2)   (no Z@Gamma temp)
    row_sum_z2 = jnp.sum(Z * Z, axis=1, keepdims=True)
    term3 = (-0.5 * inv_d2) * (d * row_sum_z2 - row_sum_z * row_sum_z)

    loss_rows = ce - term1 - term2 - term3                             # (tn, 1)

    # ragged last tile: select (not multiply) so garbage/NaN rows cannot leak
    row_idx = step * tn + lax.broadcasted_iota(jnp.int32, (tn, 1), 0)
    loss_rows = jnp.where(row_idx < n_valid, loss_rows, 0.0)

    partial = jnp.sum(loss_rows)
    # lane-dense per-tile partial-sum block (unmasked vst); wrapper reads [i,0,0]
    out_ref[...] = jnp.broadcast_to(partial, out_ref.shape).astype(out_ref.dtype)


def distortion_taylor_approx_loss(W, b, mean, var, labels):
    """Pallas TPU implementation of DistortionTaylorApproxLoss.forward."""
    d, K = W.shape
    N = labels.shape[0]
    itemsize = jnp.dtype(mean.dtype).itemsize

    # ---- VMEM-budget-driven batch tile ------------------------------------
    try:
        vmem_cap = int(pltpu.get_tpu_info().vmem_capacity_bytes)
    except Exception:
        vmem_cap = 64 * 1024 * 1024          # conservative (v7x per-TC VMEM)

    k_lanes = _round_up(K, 128)              # physical lane footprint of a row
    stream_budget = int(vmem_cap * 0.4)      # ~25 MiB on v7x, ~51 MiB on v5e/v6e
    tn = stream_budget // (2 * 2 * k_lanes * itemsize)   # 2 streams x 2 buffers
    tn = max(8, min(4096, (tn // 8) * 8))
    tn = min(tn, _round_up(N, 8))
    num_tiles = int(pl.cdiv(N, tn))

    stream_bytes = 2 * 2 * tn * k_lanes * itemsize
    vmem_limit = int(min(int(vmem_cap * 0.9),
                         max(32 << 20, stream_bytes + (16 << 20))))

    # ---- tiny grid-invariant constants (big mean/var pass through unpadded) -
    f32 = jnp.float32
    W32 = W.astype(f32)
    col_sum = jnp.sum(W32, axis=0, keepdims=True)                      # (1, K)
    sq_sum = jnp.sum(W32 * W32, axis=0, keepdims=True)                 # (1, K)
    h_diag = -(d * sq_sum - col_sum * col_sum) / float(d * d)          # (1, K)
    b2 = b.reshape(1, d).astype(f32)
    labels2 = labels.astype(jnp.int32).reshape(N, 1)

    kernel = functools.partial(_loss_kernel, n_valid=N)

    grid_spec = pltpu.PrefetchScalarGridSpec(
        num_scalar_prefetch=0,
        grid=(num_tiles,),
        in_specs=[
            pl.BlockSpec((d, K), lambda i: (0, 0)),        # W       (resident)
            pl.BlockSpec((1, d), lambda i: (0, 0)),        # b       (resident)
            pl.BlockSpec((1, K), lambda i: (0, 0)),        # diag(H) (resident)
            pl.BlockSpec((tn, 1), lambda i: (i, 0)),       # labels
            pl.BlockSpec((tn, K), lambda i: (i, 0)),       # mean    (streamed)
            pl.BlockSpec((tn, K), lambda i: (i, 0)),       # var     (streamed)
        ],
        out_specs=pl.BlockSpec((1, 8, 128), lambda i: (i, 0, 0)),
    )

    partials = pl.pallas_call(
        kernel,
        out_shape=jax.ShapeDtypeStruct((num_tiles, 8, 128), f32),
        grid_spec=grid_spec,
        compiler_params=pltpu.CompilerParams(
            dimension_semantics=("parallel",),   # independent tiles -> megacore
            vmem_limit_bytes=vmem_limit,
        ),
    )(W, b2, h_diag, labels2, mean, var)

    # trivial XLA reduce over num_tiles scalars
    return jnp.sum(partials[:, 0, 0]) / N


def _reference_loss(W, b, mean, var, labels):
    """Pure-JAX port of the PyTorch forward, for numerical verification."""
    d, K = W.shape
    N = labels.shape[0]
    Gamma = (1.0 / d**2) * (jnp.diag(jnp.ones(d) * d) - jnp.ones((d, d)))
    outputs = jnp.zeros((N, K)) @ W.T + b[None, :]
    logp_theta = jax.nn.log_softmax(outputs, axis=1)[jnp.arange(N), labels]
    grad_f = (jax.nn.one_hot(labels, d) - 1.0 / d) @ W
    H = -W.T @ Gamma @ W
    loss = (-logp_theta
            - jnp.sum(grad_f * mean, axis=1)
            - 0.5 * jnp.sum(jnp.diag(H)[None, :] * var, axis=1)
            - 0.5 * jnp.sum(mean * (mean @ H.T), axis=1))
    return jnp.mean(loss)


if __name__ == "__main__":
    key = jax.random.PRNGKey(0)
    d, K, N = 4, 32, 8  # num_classes, feature_dim, batch

    k1, k2, k3, k4, k5 = jax.random.split(key, 5)
    W = jax.random.normal(k1, (d, K), jnp.float32)
    b = jax.random.normal(k2, (d,), jnp.float32)
    mean = jax.random.normal(k3, (N, K), jnp.float32)
    var = jax.nn.softplus(jax.random.normal(k4, (N, K), jnp.float32))  # positive variances
    labels = jax.random.randint(k5, (N,), 0, d, dtype=jnp.int32)

    loss = distortion_taylor_approx_loss(W, b, mean, var, labels)
    jax.block_until_ready(loss)

    ref = _reference_loss(W, b, mean, var, labels)
    assert jnp.allclose(loss, ref, rtol=1e-4, atol=1e-4), (loss, ref)

    print("KERNEL_OK")
</pallas_src>

<mosaic_0001>
module attributes {stable_mosaic.version = 11 : i64} {
  func.func @_loss_kernel(%arg0: i32, %arg1: memref<4x32xf32, #tpu.memory_space<vmem>>, %arg2: memref<1x4xf32, #tpu.memory_space<vmem>>, %arg3: memref<1x32xf32, #tpu.memory_space<vmem>>, %arg4: memref<8x1xi32, #tpu.memory_space<vmem>>, %arg5: memref<8x32xf32, #tpu.memory_space<vmem>>, %arg6: memref<8x32xf32, #tpu.memory_space<vmem>>, %arg7: memref<1x8x128xf32, #tpu.memory_space<vmem>>) attributes {dimension_semantics = [#tpu.dimension_semantics<parallel>], iteration_bounds = array<i64: 1>, scalar_prefetch = 0 : i64, scratch_operands = 0 : i64, tpu.core_type = #tpu.core_type<tc>, window_params = [{pipeline_mode = #tpu.pipeline_mode<synchronous>, transform_indices = @transform_0, window_bounds = array<i64: 4, 32>}, {pipeline_mode = #tpu.pipeline_mode<synchronous>, transform_indices = @transform_1, window_bounds = array<i64: 1, 4>}, {pipeline_mode = #tpu.pipeline_mode<synchronous>, transform_indices = @transform_2, window_bounds = array<i64: 1, 32>}, {transform_indices = @transform_3, window_bounds = array<i64: 8, 1>}, {transform_indices = @transform_4, window_bounds = array<i64: 8, 32>}, {transform_indices = @transform_5, window_bounds = array<i64: 8, 32>}, {transform_indices = @transform_6, window_bounds = array<i64: 1, 8, 128>}]} {
    %c0 = arith.constant 0 : index
    %c0_0 = arith.constant 0 : index
    %0 = vector.load %arg5[%c0, %c0_0] : memref<8x32xf32, #tpu.memory_space<vmem>>, vector<8x32xf32>
    %c0_1 = arith.constant 0 : index
    %c0_2 = arith.constant 0 : index
    %1 = vector.load %arg6[%c0_1, %c0_2] : memref<8x32xf32, #tpu.memory_space<vmem>>, vector<8x32xf32>
    %c0_3 = arith.constant 0 : index
    %c0_4 = arith.constant 0 : index
    %2 = vector.load %arg4[%c0_3, %c0_4] : memref<8x1xi32, #tpu.memory_space<vmem>>, vector<8x1xi32>
    %c0_5 = arith.constant 0 : index
    %c0_6 = arith.constant 0 : index
    %3 = vector.load %arg2[%c0_5, %c0_6] : memref<1x4xf32, #tpu.memory_space<vmem>>, vector<1x4xf32>
    %c0_7 = arith.constant 0 : index
    %c0_8 = arith.constant 0 : index
    %4 = vector.load %arg3[%c0_7, %c0_8] : memref<1x32xf32, #tpu.memory_space<vmem>>, vector<1x32xf32>
    %c0_9 = arith.constant 0 : index
    %c0_10 = arith.constant 0 : index
    %5 = vector.load %arg1[%c0_9, %c0_10] : memref<4x32xf32, #tpu.memory_space<vmem>>, vector<4x32xf32>
    %cst = arith.constant dense<0xFF800000> : vector<1xf32>
    %6 = vector.multi_reduction <maximumf>, %3, %cst [1] : vector<1x4xf32> to vector<1xf32>
    %7 = vector.shape_cast %6 : vector<1xf32> to vector<1x1xf32>
    %8 = vector.broadcast %7 : vector<1x1xf32> to vector<1x4xf32>
    %9 = arith.subf %3, %8 : vector<1x4xf32>
    %10 = math.exp %9 : vector<1x4xf32>
    %cst_11 = arith.constant dense<0.000000e+00> : vector<1xf32>
    %11 = vector.multi_reduction <add>, %10, %cst_11 [1] : vector<1x4xf32> to vector<1xf32>
    %12 = vector.shape_cast %11 : vector<1xf32> to vector<1x1xf32>
    %13 = math.log %12 : vector<1x1xf32>
    %14 = arith.addf %7, %13 : vector<1x1xf32>
    %cst_12 = arith.constant dense<0.000000e+00> : vector<8x4xf32>
    %15 = tpu.matmul %0, %5, %cst_12 {dimension_numbers = #tpu.dot_dimension_numbers<[1], [1], [0], [0], [0, 0, 1, 0], [], []>} : vector<8x32xf32>, vector<4x32xf32>, vector<8x4xf32> -> vector<8x4xf32>
    %16 = tpu.iota {dimensions = array<i32: 1>} : vector<8x4xi32>
    %17 = vector.broadcast %2 : vector<8x1xi32> to vector<8x4xi32>
    %18 = arith.cmpi eq, %16, %17 : vector<8x4xi32>
    %cst_13 = arith.constant 0.000000e+00 : f32
    %19 = vector.shape_cast %3 : vector<1x4xf32> to vector<1x4xf32>
    %20 = vector.broadcast %19 : vector<1x4xf32> to vector<8x4xf32>
    %21 = vector.broadcast %cst_13 : f32 to vector<8x4xf32>
    %22 = arith.select %18, %20, %21 : vector<8x4xi1>, vector<8x4xf32>
    %cst_14 = arith.constant dense<0.000000e+00> : vector<8xf32>
    %23 = vector.multi_reduction <add>, %22, %cst_14 [1] : vector<8x4xf32> to vector<8xf32>
    %24 = vector.shape_cast %23 : vector<8xf32> to vector<8x1xf32>
    %cst_15 = arith.constant 0.000000e+00 : f32
    %25 = vector.broadcast %cst_15 : f32 to vector<8x4xf32>
    %26 = arith.select %18, %15, %25 : vector<8x4xi1>, vector<8x4xf32>
    %cst_16 = arith.constant dense<0.000000e+00> : vector<8xf32>
    %27 = vector.multi_reduction <add>, %26, %cst_16 [1] : vector<8x4xf32> to vector<8xf32>
    %28 = vector.shape_cast %27 : vector<8xf32> to vector<8x1xf32>
    %29 = vector.broadcast %14 : vector<1x1xf32> to vector<8x1xf32>
    %30 = arith.subf %29, %24 : vector<8x1xf32>
    %cst_17 = arith.constant dense<0.000000e+00> : vector<8xf32>
    %31 = vector.multi_reduction <add>, %15, %cst_17 [1] : vector<8x4xf32> to vector<8xf32>
    %32 = vector.shape_cast %31 : vector<8xf32> to vector<8x1xf32>
    %cst_18 = arith.constant 2.500000e-01 : f32
    %33 = vector.broadcast %cst_18 : f32 to vector<8x1xf32>
    %34 = arith.mulf %32, %33 : vector<8x1xf32>
    %35 = arith.subf %28, %34 : vector<8x1xf32>
    %36 = vector.broadcast %4 : vector<1x32xf32> to vector<8x32xf32>
    %37 = arith.mulf %36, %1 : vector<8x32xf32>
    %cst_19 = arith.constant dense<0.000000e+00> : vector<8xf32>
    %38 = vector.multi_reduction <add>, %37, %cst_19 [1] : vector<8x32xf32> to vector<8xf32>
    %39 = vector.shape_cast %38 : vector<8xf32> to vector<8x1xf32>
    %cst_20 = arith.constant 5.000000e-01 : f32
    %40 = vector.broadcast %cst_20 : f32 to vector<8x1xf32>
    %41 = arith.mulf %40, %39 : vector<8x1xf32>
    %42 = arith.mulf %15, %15 : vector<8x4xf32>
    %cst_21 = arith.constant dense<0.000000e+00> : vector<8xf32>
    %43 = vector.multi_reduction <add>, %42, %cst_21 [1] : vector<8x4xf32> to vector<8xf32>
    %44 = vector.shape_cast %43 : vector<8xf32> to vector<8x1xf32>
    %cst_22 = arith.constant 4.000000e+00 : f32
    %45 = vector.broadcast %cst_22 : f32 to vector<8x1xf32>
    %46 = arith.mulf %45, %44 : vector<8x1xf32>
    %47 = arith.mulf %32, %32 : vector<8x1xf32>
    %48 = arith.subf %46, %47 : vector<8x1xf32>
    %cst_23 = arith.constant -3.125000e-02 : f32
    %49 = vector.broadcast %cst_23 : f32 to vector<8x1xf32>
    %50 = arith.mulf %49, %48 : vector<8x1xf32>
    %51 = arith.subf %30, %35 : vector<8x1xf32>
    %52 = arith.subf %51, %41 : vector<8x1xf32>
    %53 = arith.subf %52, %50 : vector<8x1xf32>
    %c8_i32 = arith.constant 8 : i32
    %54 = arith.muli %arg0, %c8_i32 : i32
    %55 = tpu.iota {dimensions = array<i32: 0>} : vector<8x1xi32>
    %56 = vector.broadcast %54 : i32 to vector<8x1xi32>
    %57 = arith.addi %56, %55 : vector<8x1xi32>
    %c8_i32_24 = arith.constant 8 : i32
    %58 = vector.broadcast %c8_i32_24 : i32 to vector<8x1xi32>
    %59 = arith.cmpi slt, %57, %58 : vector<8x1xi32>
    %cst_25 = arith.constant 0.000000e+00 : f32
    %60 = vector.broadcast %cst_25 : f32 to vector<8x1xf32>
    %61 = arith.select %59, %53, %60 : vector<8x1xi1>, vector<8x1xf32>
    %62 = vector.shape_cast %61 : vector<8x1xf32> to vector<1x8x1xf32>
    %cst_26 = arith.constant dense<0.000000e+00> : vector<1xf32>
    %63 = vector.multi_reduction <add>, %62, %cst_26 [1, 2] : vector<1x8x1xf32> to vector<1xf32>
    %64 = vector.shape_cast %63 : vector<1xf32> to vector<1x1x1xf32>
    %65 = vector.extract %64[0, 0, 0] : f32 from vector<1x1x1xf32>
    %66 = vector.broadcast %65 : f32 to vector<1x8x128xf32>
    %c0_27 = arith.constant 0 : index
    %c0_28 = arith.constant 0 : index
    %c0_29 = arith.constant 0 : index
    %67 = vector.load %arg7[%c0_27, %c0_28, %c0_29] : memref<1x8x128xf32, #tpu.memory_space<vmem>>, vector<1x8x128xf32>
    tpu.vector_store %arg7[%c0_27, %c0_28, %c0_29], %66 {strides = array<i32>} : memref<1x8x128xf32, #tpu.memory_space<vmem>>, vector<1x8x128xf32>,
    return
  }
  func.func @transform_0(%arg0: i32) -> (i32, i32) {
    %c0_i32 = arith.constant 0 : i32
    %c0_i32_0 = arith.constant 0 : i32
    %c0_i32_1 = arith.constant 0 : i32
    return %c0_i32, %c0_i32_0 : i32, i32
  }
  func.func @transform_1(%arg0: i32) -> (i32, i32) {
    %c0_i32 = arith.constant 0 : i32
    %c0_i32_0 = arith.constant 0 : i32
    %c0_i32_1 = arith.constant 0 : i32
    return %c0_i32, %c0_i32_0 : i32, i32
  }
  func.func @transform_2(%arg0: i32) -> (i32, i32) {
    %c0_i32 = arith.constant 0 : i32
    %c0_i32_0 = arith.constant 0 : i32
    %c0_i32_1 = arith.constant 0 : i32
    return %c0_i32, %c0_i32_0 : i32, i32
  }
  func.func @transform_3(%arg0: i32) -> (i32, i32) {
    %c0_i32 = arith.constant 0 : i32
    %c0_i32_0 = arith.constant 0 : i32
    return %arg0, %c0_i32 : i32, i32
  }
  func.func @transform_4(%arg0: i32) -> (i32, i32) {
    %c0_i32 = arith.constant 0 : i32
    %c0_i32_0 = arith.constant 0 : i32
    return %arg0, %c0_i32 : i32, i32
  }
  func.func @transform_5(%arg0: i32) -> (i32, i32) {
    %c0_i32 = arith.constant 0 : i32
    %c0_i32_0 = arith.constant 0 : i32
    return %arg0, %c0_i32 : i32, i32
  }
  func.func @transform_6(%arg0: i32) -> (i32, i32, i32) {
    %c0_i32 = arith.constant 0 : i32
    %c0_i32_0 = arith.constant 0 : i32
    %c0_i32_1 = arith.constant 0 : i32
    return %arg0, %c0_i32, %c0_i32_0 : i32, i32, i32
  }
}

</mosaic_0001>

<llo_original>
// kernel: tpu_custom_call.1
$region0: #{tpu_custom_call.1}
  #allocation0 [shape = 'u32[]', space=smem, size = 0x4, offset = 0x4, fixed_abs, tag = 'smem constant byte address 0x4 - core index']
  #allocation1 [shape = 'u32[144,128]{1,0:T(1,128)}', space=vmem, size = 0x12000, scoped, tag = 'internal scratch']
  %s0 = inlined_call_operand.hbm [shape: f32[4,32], index: 0, kind: input, shape index: {}]
  %s1 = inlined_call_operand.hbm [shape: f32[1,4], index: 1, kind: input, shape index: {}]
  %s2 = inlined_call_operand.hbm [shape: f32[1,32], index: 2, kind: input, shape index: {}]
  %s3 = inlined_call_operand.vmem [shape: s32[8,1], index: 3, kind: input, shape index: {}]
  %s4 = inlined_call_operand.vmem [shape: f32[8,32], index: 4, kind: input, shape index: {}]
  %s5 = inlined_call_operand.vmem [shape: f32[8,32], index: 5, kind: input, shape index: {}]
  %s6 = inlined_call_operand.hbm [shape: f32[1,8,128], index: 6, kind: output, shape index: {}]
  %s7 = sld [smem:[#allocation0]]
  $region46: #{tpu_custom_call.1} parent=0
    _
  %s9 = ssub.s32 1, %s7
  %s10 = scalar_select 0, %s9, %s7
  $region1: #{tpu_custom_call.1} parent=0
    #allocation2 [shape = 'u8[2048]{0}', space=vmem, size = 0x800, scoped, tag = 'input window, operand 0, single buffered']
    #allocation3 [shape = 's32[1]{0}', space=sflag, size = 0x4, scoped, tag = 'scoped memory for tpu_custom_call.1']
    #allocation4 [shape = 's32[1]{0}', space=sflag, size = 0x4, scoped, tag = 'scoped memory for tpu_custom_call.1']
    #allocation5 [shape = 'u8[512]{0}', space=vmem, size = 0x400, scoped, tag = 'input window, operand 1, single buffered']
    #allocation6 [shape = 's32[1]{0}', space=sflag, size = 0x4, scoped, tag = 'scoped memory for tpu_custom_call.1']
    #allocation7 [shape = 'u8[512]{0}', space=vmem, size = 0x400, scoped, tag = 'input window, operand 2, single buffered']
    #allocation8 [shape = 'u8[4096]{0}', space=vmem, size = 0x1000, scoped, tag = 'output window, operand 0, single buffered']
    %11 = vsyncpa [#allocation3], 0
    %12 = vsyncpa [#allocation6], 0
    %13 = vsyncpa [#allocation4], 0
    // Predicated region
    $region2: #{tpu_custom_call.1} parent=1 // pred_check
      _
    $region3: #{tpu_custom_call.1} parent=1 // pred_check_branch
      %15 = sbr.rel (0) target = $region5
    $region4: #{tpu_custom_call.1} parent=1 // pred_region
      %s17 = ssub.s32 64, 64
      %18 = vsyncadd [#allocation3], %s17
      %s20 = sshll.u32 [#allocation2], 4
      %s21 = int_to_ptr.vmem [resolvable:$true] %s20
      %23 = dma.hbm_to_vmem [thread:$0]  %s0, 64, %s21, [#allocation3]
    $region5: #{tpu_custom_call.1} parent=1 // pred_fallthru
      _
    // Predicated region
    $region6: #{tpu_custom_call.1} parent=1 // pred_check
      _
    $region7: #{tpu_custom_call.1} parent=1 // pred_check_branch
      %25 = sbr.rel (0) target = $region9
    $region8: #{tpu_custom_call.1} parent=1 // pred_region
      %s27 = ssub.s32 16, 16
      %28 = vsyncadd [#allocation6], %s27
      %s30 = sshll.u32 [#allocation5], 4
      %s31 = int_to_ptr.vmem [resolvable:$true] %s30
      %33 = dma.hbm_to_vmem [thread:$0]  %s1, 16, %s31, [#allocation6]
    $region9: #{tpu_custom_call.1} parent=1 // pred_fallthru
      _
    // Predicated region
    $region10: #{tpu_custom_call.1} parent=1 // pred_check
      _
    $region11: #{tpu_custom_call.1} parent=1 // pred_check_branch
      %35 = sbr.rel (0) target = $region13
    $region12: #{tpu_custom_call.1} parent=1 // pred_region
      %s37 = ssub.s32 16, 16
      %38 = vsyncadd [#allocation6], %s37
      %s40 = sshll.u32 [#allocation7], 4
      %s41 = int_to_ptr.vmem [resolvable:$true] %s40
      %43 = dma.hbm_to_vmem [thread:$0]  %s2, 16, %s41, [#allocation6]
    $region13: #{tpu_custom_call.1} parent=1 // pred_fallthru
      _
    // Predicated region
    $region14: #{tpu_custom_call.1} parent=1 // pred_check
      _
    $region15: #{tpu_custom_call.1} parent=1 // pred_check_branch
      %45 = sbr.rel (0) target = $region17
    $region16: #{tpu_custom_call.1} parent=1 // pred_region
      _
    $region17: #{tpu_custom_call.1} parent=1 // pred_fallthru
      _
    // Predicated region
    $region18: #{tpu_custom_call.1} parent=1 // pred_check
      _
    $region19: #{tpu_custom_call.1} parent=1 // pred_check_branch
      %47 = sbr.rel (0) target = $region21
    $region20: #{tpu_custom_call.1} parent=1 // pred_region
      _
    $region21: #{tpu_custom_call.1} parent=1 // pred_fallthru
      _
    // Predicated region
    $region22: #{tpu_custom_call.1} parent=1 // pred_check
      _
    $region23: #{tpu_custom_call.1} parent=1 // pred_check_branch
      %49 = sbr.rel (0) target = $region25
    $region24: #{tpu_custom_call.1} parent=1 // pred_region
      _
    $region25: #{tpu_custom_call.1} parent=1 // pred_fallthru
      _
    // Predicated region
    $region26: #{tpu_custom_call.1} parent=1 // pred_check
      _
    $region27: #{tpu_custom_call.1} parent=1 // pred_check_branch
      %51 = sbr.rel (0) target = $region29
    $region28: #{tpu_custom_call.1} parent=1 // pred_region
      %52 = dma.done [#allocation3], 64
    $region29: #{tpu_custom_call.1} parent=1 // pred_fallthru
      _
    // Predicated region
    $region30: #{tpu_custom_call.1} parent=1 // pred_check
      _
    $region31: #{tpu_custom_call.1} parent=1 // pred_check_branch
      %54 = sbr.rel (0) target = $region33
    $region32: #{tpu_custom_call.1} parent=1 // pred_region
      %55 = dma.done [#allocation6], 16
    $region33: #{tpu_custom_call.1} parent=1 // pred_fallthru
      _
    // Predicated region
    $region34: #{tpu_custom_call.1} parent=1 // pred_check
      _
    $region35: #{tpu_custom_call.1} parent=1 // pred_check_branch
      %57 = sbr.rel (0) target = $region37
    $region36: #{tpu_custom_call.1} parent=1 // pred_region
      %58 = dma.done [#allocation6], 16
    $region37: #{tpu_custom_call.1} parent=1 // pred_fallthru
      _
    %v59 = vld [vmem:[%s4] sm:$0xff]
    %v60 = vld [vmem:[%s5] sm:$0xff]
    %v61 = vld [vmem:[%s3] sm:$0xff]
    %v62 = vld [vmem:[#allocation5] sm:$0x1]
    %v63 = vld [vmem:[#allocation7] sm:$0x1]
    %v64 = vld [vmem:[#allocation2] sm:$0xf]
    %vm65 = vcmask 24576
    %v66 = vsel %vm65, %v62, -inf
    %67 = vmax.xlane.f32.xlu0 %v66
    %v68 = vpop.xlane.xlu0 %67
    %v69 = vsub.f32 %v62, %v68
    %v70 = vmul.f32 %v69, 1.442695
    %v71 = vpow.pop %v70
    %v72 = vsel %vm65, %v71, 0.0
    %73 = vadd.xlane.f32.xlu0 %v72
    %v74 = vpop.xlane.xlu0 %73
    %v75 = vlog2.pop %v74
    %v76 = vmul.f32 %v75, 0.6931472
    %v77 = vadd.f32 %v68, %v76
    %vm78 = vcmask 261120
    %v80 = vsel %vm78, %v59, 0
    %v83 = vsel %vm78, %v64, 0
    %85 = vmatprep.subr.mxu0 0.0
    %86 = vmatpush1.xpose.msra.mxu0 %v83
    %87 = vmatprep.subr.mxu0 0.0
    %88 = vmatpush1.xpose.msra.mxu0 0.0
    %89 = vmatprep.subr.mxu0 0.0
    %90 = vmatpush1.xpose.msra.mxu0 0.0
    %91 = vmatprep.subr.mxu0 0.0
    %92 = vmatpush1.xpose.msra.mxu0 0.0
    %93 = vmatprep.subr.mxu0 0.0
    %94 = vmatpush1.xpose.msra.mxu0 0.0
    %95 = vmatprep.subr.mxu0 0.0
    %96 = vmatpush1.xpose.msra.mxu0 0.0
    %97 = vmatprep.subr.mxu0 0.0
    %98 = vmatpush1.xpose.msra.mxu0 0.0
    %99 = vmatprep.subr.mxu0 0.0
    %100 = vmatpush1.xpose.msra.mxu0 0.0
    %101 = vmatprep.subr.mxu0 0.0
    %102 = vmatpush1.xpose.msra.mxu0 0.0
    %103 = vmatprep.subr.mxu0 0.0
    %104 = vmatpush1.xpose.msra.mxu0 0.0
    %105 = vmatprep.subr.mxu0 0.0
    %106 = vmatpush1.xpose.msra.mxu0 0.0
    %107 = vmatprep.subr.mxu0 0.0
    %108 = vmatpush1.xpose.msra.mxu0 0.0
    %109 = vmatprep.subr.mxu0 0.0
    %110 = vmatpush1.xpose.msra.mxu0 0.0
    %111 = vmatprep.subr.mxu0 0.0
    %112 = vmatpush1.xpose.msra.mxu0 0.0
    %113 = vmatprep.subr.mxu0 0.0
    %114 = vmatpush1.xpose.msra.mxu0 0.0
    %115 = vmatprep.subr.mxu0 0.0
    %116 = vmatpush1.xpose.msra.mxu0 0.0
    %117 = vmatprep.subr.mxu0 0.0
    %118 = vmatpush1.xpose.msra.mxu0 0.0
    %119 = vmatprep.subr.mxu0 0.0
    %120 = vmatpush1.xpose.msra.mxu0 0.0
    %121 = vmatprep.subr.mxu0 0.0
    %122 = vmatpush1.xpose.msra.mxu0 0.0
    %123 = vmatprep.subr.mxu0 0.0
    %124 = vmatpush1.xpose.msra.mxu0 0.0
    %125 = vmatprep.subr.mxu0 0.0
    %126 = vmatpush1.xpose.msra.mxu0 0.0
    %127 = vmatprep.subr.mxu0 0.0
    %128 = vmatpush1.xpose.msra.mxu0 0.0
    %129 = vmatprep.subr.mxu0 0.0
    %130 = vmatpush1.xpose.msra.mxu0 0.0
    %131 = vmatprep.subr.mxu0 0.0
    %132 = vmatpush1.xpose.msra.mxu0 0.0
    %133 = vmatprep.subr.mxu0 0.0
    %134 = vmatpush1.xpose.msra.mxu0 0.0
    %135 = vmatprep.subr.mxu0 0.0
    %136 = vmatpush1.xpose.msra.mxu0 0.0
    %137 = vmatprep.subr.mxu0 0.0
    %138 = vmatpush1.xpose.msra.mxu0 0.0
    %139 = vmatprep.subr.mxu0 0.0
    %140 = vmatpush1.xpose.msra.mxu0 0.0
    %141 = vmatprep.subr.mxu0 0.0
    %142 = vmatpush1.xpose.msra.mxu0 0.0
    %143 = vmatprep.subr.mxu0 0.0
    %144 = vmatpush1.xpose.msra.mxu0 0.0
    %145 = vmatprep.subr.mxu0 0.0
    %146 = vmatpush1.xpose.msra.mxu0 0.0
    %147 = vmatprep.subr.mxu0 0.0
    %148 = vmatpush1.xpose.msra.mxu0 0.0
    %149 = vmatprep.mubr.f32.mxu0 0.0
    %150 = vmatmul.mubr.f32.gmra.mrb[0].mxu0 %v80
    %v151 = vpop.f32.mrb[0].mxu0
    %v152 = vadd.f32 0.0, %v151
    %v153 = vpop.f32.mrb[0].mxu0
    %154 = vdwg.mxu0
    %v155 = vlaneseq
    %v156 = vand.u32 %v155, 127
    %157 = vset.pattern.permute.xlu0 0
    %158 = vperm.xlu0 %157, %v61
    %v159 = vpop.permute.xlu0 %158
    %vm160 = vcmp.eq.s32.totalorder %v156, %v159
    %v162 = vlaneseq
    %v163 = vshrl.u32 %v162, 7
    %v164 = vsub.s32 0, %v163
    %v165 = vrot.slane %v62, %v164
    %v167 = vsel %vm160, %v165, 0.0
    %vm168 = vcmask 31744
    %v169 = vsel %vm168, %v167, 0.0
    %170 = vadd.xlane.f32.xlu0 %v169
    %v171 = vpop.xlane.xlu0 %170
    %v172 = vsel %vm160, %v152, 0.0
    %v173 = vsel %vm168, %v172, 0.0
    %174 = vadd.xlane.f32.xlu0 %v173
    %v175 = vpop.xlane.xlu0 %174
    %v176 = vlaneseq
    %v177 = vshrl.u32 %v176, 7
    %v178 = vsub.s32 0, %v177
    %v179 = vrot.slane %v77, %v178
    %v180 = vsub.f32 %v179, %v171
    %v181 = vsel %vm168, %v152, 0.0
    %182 = vadd.xlane.f32.xlu0 %v181
    %v183 = vpop.xlane.xlu0 %182
    %v184 = vmul.f32 %v183, 0.25
    %v185 = vsub.f32 %v175, %v184
    %v187 = vlaneseq
    %v188 = vshrl.u32 %v187, 7
    %v189 = vsub.s32 0, %v188
    %v190 = vrot.slane %v63, %v189
    %v192 = vmul.f32 %v190, %v60
    %v193 = vsel %vm78, %v192, 0.0
    %194 = vadd.xlane.f32.xlu0 %v193
    %v195 = vpop.xlane.xlu0 %194
    %v196 = vmul.f32 %v195, 0.5
    %v197 = vmul.f32 %v152, %v152
    %v198 = vsel %vm168, %v197, 0.0
    %199 = vadd.xlane.f32.xlu0 %v198
    %v200 = vpop.xlane.xlu0 %199
    %v201 = vmul.f32 %v200, 4.0
    %v202 = vmul.f32 %v183, %v183
    %v203 = vsub.f32 %v201, %v202
    %v204 = vmul.f32 %v203, -0.03125
    %v205 = vsub.f32 %v180, %v185
    %v206 = vsub.f32 %v205, %v196
    %v207 = vsub.f32 %v206, %v204
    %s208 = smul.u32 0, 8
    %v209 = vlaneseq
    %v210 = vshrl.u32 %v209, 7
    %v211 = vstv %s208
    %v212 = vadd.s32 %v211, %v210
    %vm213 = vcmp.lt.s32.totalorder %v212, 8
    %v214 = vsel %vm213, %v207, 0.0
    %vm215 = vcmask 7168
    %v216 = vsel %vm215, %v214, 0.0
    %217 = vadd.xlane.f32.xlu0 %v216
    %v218 = vpop.xlane.xlu0 %217
    %v219 = vrot.slane %v218, 4
    %v220 = vadd.f32 %v218, %v219
    %v221 = vrot.slane %v220, 2
    %v222 = vadd.f32 %v220, %v221
    %v223 = vrot.slane %v222, 1
    %v224 = vadd.f32 %v222, %v223
    %s225 = vtos %v224
    %v226 = vstv %s225
    %227 = vst [vmem:[#allocation8] sm:$0xff] %v226
    // Predicated region
    $region38: #{tpu_custom_call.1} parent=1 // pred_check
      _
    $region39: #{tpu_custom_call.1} parent=1 // pred_check_branch
      %229 = sbr.rel (0) target = $region41
    $region40: #{tpu_custom_call.1} parent=1 // pred_region
      %s231 = ssub.s32 128, 128
      %232 = vsyncadd [#allocation4], %s231
      %s234 = sshll.u32 [#allocation8], 4
      %s235 = int_to_ptr.vmem [resolvable:$true] %s234
      %237 = dma.vmem_to_hbm [thread:$0]  %s235, 128, %s6, [#allocation4]
    $region41: #{tpu_custom_call.1} parent=1 // pred_fallthru
      _
    // Predicated region
    $region42: #{tpu_custom_call.1} parent=1 // pred_check
      _
    $region43: #{tpu_custom_call.1} parent=1 // pred_check_branch
      %239 = sbr.rel (0) target = $region45
    $region44: #{tpu_custom_call.1} parent=1 // pred_region
      %240 = dma.done [#allocation4], 128
    $region45: #{tpu_custom_call.1} parent=1 // pred_fallthru
      _
    %241 = vsyncpa [#allocation3], 1
    %242 = vsyncpa [#allocation6], 1
    %243 = vsyncpa [#allocation4], 1

</llo_original>
